<compile_context>
chip_gen: v7x
topology: tpu7x:2x2x1
jax: 0.10.0
libtpu: 0.0.40
codegen_flags: <defaults>
</compile_context>

<pallas_src>
import jax
import jax.numpy as jnp
from jax.experimental import pallas as pl
from jax.experimental.pallas import tpu as pltpu

LANE = 128  # TPU lane width


def _round_up(x, m):
    return ((x + m - 1) // m) * m


def _make_mlp_kernel(d_in, d1, d2, d_out, o1, o2, o3):
    """Fused 3-layer MLP kernel with static packing offsets baked in."""

    def kernel(x_ref, w_ref, b_ref, o_ref):
        wdt = w_ref.dtype
        # fc1 + ReLU: full-128-lane output; lanes >= d1 stay zero because the
        # weight / bias lane padding is zero and relu(0) = 0.
        h1 = jnp.dot(x_ref[...], w_ref[o1:o1 + d_in, :],
                     preferred_element_type=jnp.float32)
        h1 = jnp.maximum(h1 + b_ref[0:1, :], 0.0)
        # fc2 + ReLU: W2 block is zero-row-padded to a full 128 rows so the
        # full-lane h1 feeds the MXU with no lane slicing.
        h2 = jnp.dot(h1.astype(wdt), w_ref[o2:o2 + LANE, :],
                     preferred_element_type=jnp.float32)
        h2 = jnp.maximum(h2 + b_ref[1:2, :], 0.0)
        # fc3 (no ReLU), same zero-row-padded 128-row block.
        out = jnp.dot(h2.astype(wdt), w_ref[o3:o3 + LANE, :],
                      preferred_element_type=jnp.float32)
        out = out + b_ref[2:3, :]
        # Narrow writeback: store only the real d_out columns.
        o_ref[...] = out[:, :d_out].astype(o_ref.dtype)

    return kernel


def _pack_params(params, param_dtype=jnp.float32):
    """Packs w1/w2/w3 into one (rows, 128) buffer and b1/b2/b3 into (8, 128).

    w2 / w3 blocks are padded to 128 rows (zeros) so every in-kernel matmul is
    a full-lane operand with only sublane-aligned row offsets.
    """
    w1, w2, w3 = params["w1"], params["w2"], params["w3"]
    b1, b2, b3 = params["b1"], params["b2"], params["b3"]
    d_in, d1 = w1.shape
    _, d2 = w2.shape
    _, d_out = w3.shape
    assert w2.shape[0] == d1 and w3.shape[0] == d2
    assert d1 <= LANE and d2 <= LANE and d_out <= LANE

    o1 = 0
    o2 = _round_up(o1 + d_in, 8)
    o3 = o2 + LANE
    rows = o3 + LANE

    w = jnp.zeros((rows, LANE), jnp.float32)
    w = w.at[o1:o1 + d_in, 0:d1].set(w1)
    w = w.at[o2:o2 + d1, 0:d2].set(w2)
    w = w.at[o3:o3 + d2, 0:d_out].set(w3)
    w = w.astype(param_dtype)

    b = jnp.zeros((8, LANE), jnp.float32)  # biases stay f32 (added post-MXU)
    b = b.at[0, 0:d1].set(b1.reshape(-1))
    b = b.at[1, 0:d2].set(b2.reshape(-1))
    b = b.at[2, 0:d_out].set(b3.reshape(-1))

    return w, b, (d_in, d1, d2, d_out), (o1, o2, o3)


def _tiling(batch, tile_b):
    """Batch tile (multiple of 8 sublanes) and padded batch size."""
    b8 = _round_up(max(batch, 8), 8)
    tb = _round_up(max(tile_b, 8), 8)
    if b8 >= 16:
        # Keep >= 2 grid steps so the "parallel" batch axis actually splits
        # across both TensorCores on v7x (no-op on single-TC v5e / v6e).
        tb = min(tb, _round_up((b8 + 1) // 2, 8))
    else:
        tb = b8
    b_pad = _round_up(b8, tb)
    return tb, b_pad


def make_simple_nn_forward(params, *, tile_b=2048, param_dtype=jnp.float32):
    """Packs params once and returns a jitted forward(x) -> (B, d_out) f32.

    x is consumed in whatever dtype the caller supplies (pass bf16 x for the
    bf16 streaming path; MXU accumulation is always f32).
    """
    w_packed, b_packed, dims, offs = _pack_params(params, param_dtype)
    d_in, d1, d2, d_out = dims
    o1, o2, o3 = offs
    kernel = _make_mlp_kernel(d_in, d1, d2, d_out, o1, o2, o3)

    @jax.jit
    def forward(x):
        assert x.ndim == 2 and x.shape[1] == d_in
        B = x.shape[0]
        TB, B_pad = _tiling(B, tile_b)
        x_in = x if B_pad == B else jnp.pad(x, ((0, B_pad - B), (0, 0)))

        cost = pl.CostEstimate(
            flops=2 * B_pad * (d_in * d1 + d1 * d2 + d2 * d_out),
            transcendentals=0,
            bytes_accessed=(x_in.size * jnp.dtype(x_in.dtype).itemsize
                            + w_packed.size * jnp.dtype(w_packed.dtype).itemsize
                            + b_packed.size * 4
                            + B_pad * d_out * 4),
        )

        out = pl.pallas_call(
            kernel,
            out_shape=jax.ShapeDtypeStruct((B_pad, d_out), jnp.float32),
            grid=(B_pad // TB,),
            in_specs=[
                # x: batch-tiled, double-buffered stream.
                pl.BlockSpec((TB, d_in), lambda i: (i, 0)),
                # Packed weights / biases: constant index map -> VMEM-resident,
                # not re-DMA'd across grid steps.
                pl.BlockSpec(w_packed.shape, lambda i: (0, 0)),
                pl.BlockSpec(b_packed.shape, lambda i: (0, 0)),
            ],
            # Narrow (d_out-wide) output block; last dim == full array dim.
            out_specs=pl.BlockSpec((TB, d_out), lambda i: (i, 0)),
            compiler_params=pltpu.CompilerParams(
                dimension_semantics=("parallel",),  # megacore split on v7x
            ),
            cost_estimate=cost,
        )(x_in, w_packed, b_packed)

        return out if B_pad == B else out[:B]

    return forward


def init_params(key, input_size):
    """Deterministic synthetic init matching nn.Linear shapes (transposed to (in, out))."""
    ks = jax.random.split(key, 6)

    def lin(kw, kb, fan_in, fan_out):
        bound = 1.0 / jnp.sqrt(fan_in)
        w = jax.random.uniform(kw, (fan_in, fan_out), jnp.float32, -bound, bound)
        b = jax.random.uniform(kb, (1, fan_out), jnp.float32, -bound, bound)
        return w, b

    w1, b1 = lin(ks[0], ks[1], input_size, 16)
    w2, b2 = lin(ks[2], ks[3], 16, 8)
    w3, b3 = lin(ks[4], ks[5], 8, 2)
    return dict(w1=w1, b1=b1, w2=w2, b2=b2, w3=w3, b3=b3)


def _reference(x, params):
    h1 = jnp.maximum(x @ params["w1"] + params["b1"], 0.0)
    h2 = jnp.maximum(h1 @ params["w2"] + params["b2"], 0.0)
    return h2 @ params["w3"] + params["b3"]


if __name__ == "__main__":
    key = jax.random.PRNGKey(0)
    k_x, k_x2, k_p = jax.random.split(key, 3)

    input_size = 32
    params = init_params(k_p, input_size)
    forward = make_simple_nn_forward(params)

    # Small batch: single grid step.
    batch = 8
    x = jax.random.normal(k_x, (batch, input_size), jnp.float32)
    out = jax.block_until_ready(forward(x))
    ref = _reference(x, params)
    assert out.shape == (batch, 2)
    assert jnp.allclose(out, ref, atol=1e-4, rtol=1e-4)

    # Non-multiple-of-8 batch: exercises batch padding and a >=2-step grid.
    big_batch = 200
    x_big = jax.random.normal(k_x2, (big_batch, input_size), jnp.float32)
    out_big = jax.block_until_ready(forward(x_big))
    ref_big = _reference(x_big, params)
    assert out_big.shape == (big_batch, 2)
    assert jnp.allclose(out_big, ref_big, atol=1e-4, rtol=1e-4)

    # bf16 streaming path: caller supplies bf16 x, weights packed to bf16 once;
    # f32 MXU accumulation. Checked against the f32 reference with a bf16 tolerance.
    forward_bf16 = make_simple_nn_forward(params, param_dtype=jnp.bfloat16)
    out_bf16 = jax.block_until_ready(forward_bf16(x_big.astype(jnp.bfloat16)))
    assert out_bf16.shape == (big_batch, 2)
    assert bool(jnp.all(jnp.isfinite(out_bf16)))
    assert jnp.allclose(out_bf16, ref_big, atol=5e-2, rtol=5e-2)

    print("KERNEL_OK")
</pallas_src>

<mosaic_0001>
module attributes {stable_mosaic.version = 11 : i64} {
  func.func @kernel(%arg0: i32, %arg1: memref<8x32xf32, #tpu.memory_space<vmem>>, %arg2: memref<288x128xf32, #tpu.memory_space<vmem>>, %arg3: memref<8x128xf32, #tpu.memory_space<vmem>>, %arg4: memref<8x2xf32, #tpu.memory_space<vmem>>) attributes {dimension_semantics = [#tpu.dimension_semantics<parallel>], iteration_bounds = array<i64: 1>, scalar_prefetch = 0 : i64, scratch_operands = 0 : i64, tpu.core_type = #tpu.core_type<tc>, window_params = [{transform_indices = @transform_0, window_bounds = array<i64: 8, 32>}, {pipeline_mode = #tpu.pipeline_mode<synchronous>, transform_indices = @transform_1, window_bounds = array<i64: 288, 128>}, {pipeline_mode = #tpu.pipeline_mode<synchronous>, transform_indices = @transform_2, window_bounds = array<i64: 8, 128>}, {transform_indices = @transform_3, window_bounds = array<i64: 8, 2>}]} {
    %c0 = arith.constant 0 : index
    %c0_0 = arith.constant 0 : index
    %0 = vector.load %arg1[%c0, %c0_0] : memref<8x32xf32, #tpu.memory_space<vmem>>, vector<8x32xf32>
    %c0_1 = arith.constant 0 : index
    %c0_2 = arith.constant 0 : index
    %1 = vector.load %arg2[%c0_1, %c0_2] : memref<288x128xf32, #tpu.memory_space<vmem>>, vector<32x128xf32>
    %cst = arith.constant dense<0.000000e+00> : vector<8x128xf32>
    %2 = tpu.matmul %0, %1, %cst {dimension_numbers = #tpu.dot_dimension_numbers<[1], [0], [0], [1], [0, 0, 1, 1], [], []>} : vector<8x32xf32>, vector<32x128xf32>, vector<8x128xf32> -> vector<8x128xf32>
    %c0_3 = arith.constant 0 : index
    %c0_4 = arith.constant 0 : index
    %3 = vector.load %arg3[%c0_3, %c0_4] : memref<8x128xf32, #tpu.memory_space<vmem>>, vector<1x128xf32>
    %4 = vector.broadcast %3 : vector<1x128xf32> to vector<8x128xf32>
    %5 = arith.addf %2, %4 : vector<8x128xf32>
    %cst_5 = arith.constant 0.000000e+00 : f32
    %6 = vector.broadcast %cst_5 : f32 to vector<8x128xf32>
    %7 = arith.maximumf %5, %6 : vector<8x128xf32>
    %c32 = arith.constant 32 : index
    %c0_6 = arith.constant 0 : index
    %8 = vector.load %arg2[%c32, %c0_6] : memref<288x128xf32, #tpu.memory_space<vmem>>, vector<128x128xf32>
    %cst_7 = arith.constant dense<0.000000e+00> : vector<8x128xf32>
    %9 = tpu.matmul %7, %8, %cst_7 {dimension_numbers = #tpu.dot_dimension_numbers<[1], [0], [0], [1], [0, 0, 1, 1], [], []>} : vector<8x128xf32>, vector<128x128xf32>, vector<8x128xf32> -> vector<8x128xf32>
    %c1 = arith.constant 1 : index
    %c0_8 = arith.constant 0 : index
    %10 = vector.load %arg3[%c1, %c0_8] : memref<8x128xf32, #tpu.memory_space<vmem>>, vector<1x128xf32>
    %11 = vector.broadcast %10 : vector<1x128xf32> to vector<8x128xf32>
    %12 = arith.addf %9, %11 : vector<8x128xf32>
    %cst_9 = arith.constant 0.000000e+00 : f32
    %13 = vector.broadcast %cst_9 : f32 to vector<8x128xf32>
    %14 = arith.maximumf %12, %13 : vector<8x128xf32>
    %c160 = arith.constant 160 : index
    %c0_10 = arith.constant 0 : index
    %15 = vector.load %arg2[%c160, %c0_10] : memref<288x128xf32, #tpu.memory_space<vmem>>, vector<128x128xf32>
    %cst_11 = arith.constant dense<0.000000e+00> : vector<8x128xf32>
    %16 = tpu.matmul %14, %15, %cst_11 {dimension_numbers = #tpu.dot_dimension_numbers<[1], [0], [0], [1], [0, 0, 1, 1], [], []>} : vector<8x128xf32>, vector<128x128xf32>, vector<8x128xf32> -> vector<8x128xf32>
    %c2 = arith.constant 2 : index
    %c0_12 = arith.constant 0 : index
    %17 = vector.load %arg3[%c2, %c0_12] : memref<8x128xf32, #tpu.memory_space<vmem>>, vector<1x128xf32>
    %18 = vector.broadcast %17 : vector<1x128xf32> to vector<8x128xf32>
    %19 = arith.addf %16, %18 : vector<8x128xf32>
    %20 = vector.extract_strided_slice %19 {offsets = [0, 0], sizes = [8, 2], strides = [1, 1]} : vector<8x128xf32> to vector<8x2xf32>
    %c0_13 = arith.constant 0 : index
    %c0_14 = arith.constant 0 : index
    %21 = vector.load %arg4[%c0_13, %c0_14] : memref<8x2xf32, #tpu.memory_space<vmem>>, vector<8x2xf32>
    tpu.vector_store %arg4[%c0_13, %c0_14], %20 {strides = array<i32>} : memref<8x2xf32, #tpu.memory_space<vmem>>, vector<8x2xf32>,
    return
  }
  func.func @transform_0(%arg0: i32) -> (i32, i32) {
    %c0_i32 = arith.constant 0 : i32
    %c0_i32_0 = arith.constant 0 : i32
    return %arg0, %c0_i32 : i32, i32
  }
  func.func @transform_1(%arg0: i32) -> (i32, i32) {
    %c0_i32 = arith.constant 0 : i32
    %c0_i32_0 = arith.constant 0 : i32
    %c0_i32_1 = arith.constant 0 : i32
    return %c0_i32, %c0_i32_0 : i32, i32
  }
  func.func @transform_2(%arg0: i32) -> (i32, i32) {
    %c0_i32 = arith.constant 0 : i32
    %c0_i32_0 = arith.constant 0 : i32
    %c0_i32_1 = arith.constant 0 : i32
    return %c0_i32, %c0_i32_0 : i32, i32
  }
  func.func @transform_3(%arg0: i32) -> (i32, i32) {
    %c0_i32 = arith.constant 0 : i32
    %c0_i32_0 = arith.constant 0 : i32
    return %arg0, %c0_i32 : i32, i32
  }
}

</mosaic_0001>

<llo_original>
// kernel: forward.1
$region0: #{forward.1}
  #allocation0 [shape = 'u32[]', space=smem, size = 0x4, offset = 0x4, fixed_abs, tag = 'smem constant byte address 0x4 - core index']
  #allocation1 [shape = 'u32[144,128]{1,0:T(1,128)}', space=vmem, size = 0x12000, scoped, tag = 'internal scratch']
  %s0 = inlined_call_operand.hbm [shape: f32[8,32], index: 0, kind: input, shape index: {}]
  %s1 = inlined_call_operand.hbm [shape: f32[288,128], index: 1, kind: input, shape index: {}]
  %s2 = inlined_call_operand.hbm [shape: f32[8,128], index: 2, kind: input, shape index: {}]
  %s3 = inlined_call_operand.vmem [shape: f32[8,2], index: 3, kind: output, shape index: {}]
  %s4 = sld [smem:[#allocation0]]
  $region34: #{forward.1} parent=0
    _
  %s6 = ssub.s32 1, %s4
  %s7 = scalar_select 0, %s6, %s4
  $region1: #{forward.1} parent=0
    #allocation2 [shape = 'u8[4096]{0}', space=vmem, size = 0x1000, scoped, tag = 'input window, operand 0, single buffered']
    #allocation3 [shape = 's32[1]{0}', space=sflag, size = 0x4, scoped, tag = 'scoped memory for forward.1']
    #allocation4 [shape = 'u8[147456]{0}', space=vmem, size = 0x24000, scoped, tag = 'input window, operand 1, single buffered']
    #allocation5 [shape = 's32[1]{0}', space=sflag, size = 0x4, scoped, tag = 'scoped memory for forward.1']
    #allocation6 [shape = 'u8[4096]{0}', space=vmem, size = 0x1000, scoped, tag = 'input window, operand 2, single buffered']
    %8 = vsyncpa [#allocation3], 0
    %9 = vsyncpa [#allocation5], 0
    // Predicated region
    $region2: #{forward.1} parent=1 // pred_check
      _
    $region3: #{forward.1} parent=1 // pred_check_branch
      %11 = sbr.rel (0) target = $region5
    $region4: #{forward.1} parent=1 // pred_region
      %s13 = ssub.s32 128, 128
      %14 = vsyncadd [#allocation3], %s13
      %s16 = sshll.u32 [#allocation2], 4
      %s17 = int_to_ptr.vmem [resolvable:$true] %s16
      %19 = dma.hbm_to_vmem [thread:$0]  %s0, 128, %s17, [#allocation3]
    $region5: #{forward.1} parent=1 // pred_fallthru
      _
    // Predicated region
    $region6: #{forward.1} parent=1 // pred_check
      _
    $region7: #{forward.1} parent=1 // pred_check_branch
      %21 = sbr.rel (0) target = $region9
    $region8: #{forward.1} parent=1 // pred_region
      %s23 = ssub.s32 4608, 4608
      %24 = vsyncadd [#allocation5], %s23
      %s25 = sshll.u32 [#allocation4], 4
      %s26 = int_to_ptr.vmem [resolvable:$true] %s25
      %31 = dma.hbm_to_vmem [thread:$0]  %s1, 4608, %s26, [#allocation5], 128, 128, 8
    $region9: #{forward.1} parent=1 // pred_fallthru
      _
    // Predicated region
    $region10: #{forward.1} parent=1 // pred_check
      _
    $region11: #{forward.1} parent=1 // pred_check_branch
      %33 = sbr.rel (0) target = $region13
    $region12: #{forward.1} parent=1 // pred_region
      %s35 = ssub.s32 128, 128
      %36 = vsyncadd [#allocation5], %s35
      %s38 = sshll.u32 [#allocation6], 4
      %s39 = int_to_ptr.vmem [resolvable:$true] %s38
      %41 = dma.hbm_to_vmem [thread:$0]  %s2, 128, %s39, [#allocation5]
    $region13: #{forward.1} parent=1 // pred_fallthru
      _
    // Predicated region
    $region14: #{forward.1} parent=1 // pred_check
      _
    $region15: #{forward.1} parent=1 // pred_check_branch
      %43 = sbr.rel (0) target = $region17
    $region16: #{forward.1} parent=1 // pred_region
      %44 = dma.done [#allocation3], 128
    $region17: #{forward.1} parent=1 // pred_fallthru
      _
    // Predicated region
    $region18: #{forward.1} parent=1 // pred_check
      _
    $region19: #{forward.1} parent=1 // pred_check_branch
      %46 = sbr.rel (0) target = $region21
    $region20: #{forward.1} parent=1 // pred_region
      %47 = dma.done [#allocation5], 4608
    $region21: #{forward.1} parent=1 // pred_fallthru
      _
    // Predicated region
    $region22: #{forward.1} parent=1 // pred_check
      _
    $region23: #{forward.1} parent=1 // pred_check_branch
      %49 = sbr.rel (0) target = $region25
    $region24: #{forward.1} parent=1 // pred_region
      %50 = dma.done [#allocation5], 128
    $region25: #{forward.1} parent=1 // pred_fallthru
      _
    %v51 = vld [vmem:[#allocation2] sm:$0xff]
    %v52 = vld [vmem:[#allocation4] sm:$0xff]
    %v53 = vld [vmem:[#allocation4 + $0x8] sm:$0xff]
    %v54 = vld [vmem:[#allocation4 + $0x10] sm:$0xff]
    %v55 = vld [vmem:[#allocation4 + $0x18] sm:$0xff]
    %v56 = vld [vmem:[#allocation6] sm:$0x1]
    %v57 = vlaneseq
    %v58 = vshrl.u32 %v57, 7
    %v59 = vsub.s32 0, %v58
    %v60 = vrot.slane %v56, %v59
    %vm61 = vcmask 261120
    %v63 = vsel %vm61, %v51, 0
    %65 = vmatprep.subr.mxu0 0.0
    %66 = vmatpush1.msra.mxu0 %v52
    %67 = vmatprep.subr.mxu0 0.0
    %68 = vmatpush1.msra.mxu0 %v53
    %69 = vmatprep.subr.mxu0 0.0
    %70 = vmatpush1.msra.mxu0 %v54
    %71 = vmatprep.subr.mxu0 0.0
    %72 = vmatpush1.msra.mxu0 %v55
    %73 = vmatprep.subr.mxu0 0.0
    %74 = vmatpush1.msra.mxu0 0.0
    %75 = vmatprep.subr.mxu0 0.0
    %76 = vmatpush1.msra.mxu0 0.0
    %77 = vmatprep.subr.mxu0 0.0
    %78 = vmatpush1.msra.mxu0 0.0
    %79 = vmatprep.subr.mxu0 0.0
    %80 = vmatpush1.msra.mxu0 0.0
    %81 = vmatprep.subr.mxu0 0.0
    %82 = vmatpush1.msra.mxu0 0.0
    %83 = vmatprep.subr.mxu0 0.0
    %84 = vmatpush1.msra.mxu0 0.0
    %85 = vmatprep.subr.mxu0 0.0
    %86 = vmatpush1.msra.mxu0 0.0
    %87 = vmatprep.subr.mxu0 0.0
    %88 = vmatpush1.msra.mxu0 0.0
    %89 = vmatprep.subr.mxu0 0.0
    %90 = vmatpush1.msra.mxu0 0.0
    %91 = vmatprep.subr.mxu0 0.0
    %92 = vmatpush1.msra.mxu0 0.0
    %93 = vmatprep.subr.mxu0 0.0
    %94 = vmatpush1.msra.mxu0 0.0
    %95 = vmatprep.subr.mxu0 0.0
    %96 = vmatpush1.msra.mxu0 0.0
    %97 = vmatprep.subr.mxu0 0.0
    %98 = vmatpush1.msra.mxu0 0.0
    %99 = vmatprep.subr.mxu0 0.0
    %100 = vmatpush1.msra.mxu0 0.0
    %101 = vmatprep.subr.mxu0 0.0
    %102 = vmatpush1.msra.mxu0 0.0
    %103 = vmatprep.subr.mxu0 0.0
    %104 = vmatpush1.msra.mxu0 0.0
    %105 = vmatprep.subr.mxu0 0.0
    %106 = vmatpush1.msra.mxu0 0.0
    %107 = vmatprep.subr.mxu0 0.0
    %108 = vmatpush1.msra.mxu0 0.0
    %109 = vmatprep.subr.mxu0 0.0
    %110 = vmatpush1.msra.mxu0 0.0
    %111 = vmatprep.subr.mxu0 0.0
    %112 = vmatpush1.msra.mxu0 0.0
    %113 = vmatprep.subr.mxu0 0.0
    %114 = vmatpush1.msra.mxu0 0.0
    %115 = vmatprep.subr.mxu0 0.0
    %116 = vmatpush1.msra.mxu0 0.0
    %117 = vmatprep.subr.mxu0 0.0
    %118 = vmatpush1.msra.mxu0 0.0
    %119 = vmatprep.subr.mxu0 0.0
    %120 = vmatpush1.msra.mxu0 0.0
    %121 = vmatprep.subr.mxu0 0.0
    %122 = vmatpush1.msra.mxu0 0.0
    %123 = vmatprep.subr.mxu0 0.0
    %124 = vmatpush1.msra.mxu0 0.0
    %125 = vmatprep.subr.mxu0 0.0
    %126 = vmatpush1.msra.mxu0 0.0
    %127 = vmatprep.subr.mxu0 0.0
    %128 = vmatpush1.msra.mxu0 0.0
    %129 = vmatprep.mubr.f32.mxu0 0.0
    %130 = vmatmul.mubr.f32.gmra.mrb[0].mxu0 %v63
    %v131 = vpop.f32.mrb[0].mxu0
    %v132 = vadd.f32 %v60, %v131
    %v133 = vpop.f32.mrb[0].mxu0
    %134 = vdwg.mxu0
    %v135 = vmax.f32 %v132, 0.0
    %v136 = vld [vmem:[#allocation4 + $0x20] sm:$0xff]
    %v137 = vld [vmem:[#allocation4 + $0x28] sm:$0xff]
    %v138 = vld [vmem:[#allocation4 + $0x30] sm:$0xff]
    %v139 = vld [vmem:[#allocation4 + $0x38] sm:$0xff]
    %v140 = vld [vmem:[#allocation4 + $0x40] sm:$0xff]
    %v141 = vld [vmem:[#allocation4 + $0x48] sm:$0xff]
    %v142 = vld [vmem:[#allocation4 + $0x50] sm:$0xff]
    %v143 = vld [vmem:[#allocation4 + $0x58] sm:$0xff]
    %v144 = vld [vmem:[#allocation4 + $0x60] sm:$0xff]
    %v145 = vld [vmem:[#allocation4 + $0x68] sm:$0xff]
    %v146 = vld [vmem:[#allocation4 + $0x70] sm:$0xff]
    %v147 = vld [vmem:[#allocation4 + $0x78] sm:$0xff]
    %v148 = vld [vmem:[#allocation4 + $0x80] sm:$0xff]
    %v149 = vld [vmem:[#allocation4 + $0x88] sm:$0xff]
    %v150 = vld [vmem:[#allocation4 + $0x90] sm:$0xff]
    %v151 = vld [vmem:[#allocation4 + $0x98] sm:$0xff]
    %v152 = vld [vmem:[#allocation6 + $0x1] sm:$0x1]
    %v153 = vlaneseq
    %v154 = vshrl.u32 %v153, 7
    %v155 = vsub.s32 0, %v154
    %v156 = vrot.slane %v152, %v155
    %157 = vmatprep.subr.mxu0 0.0
    %158 = vmatpush1.msra.mxu0 %v136
    %159 = vmatprep.subr.mxu0 0.0
    %160 = vmatpush1.msra.mxu0 %v137
    %161 = vmatprep.subr.mxu0 0.0
    %162 = vmatpush1.msra.mxu0 %v138
    %163 = vmatprep.subr.mxu0 0.0
    %164 = vmatpush1.msra.mxu0 %v139
    %165 = vmatprep.subr.mxu0 0.0
    %166 = vmatpush1.msra.mxu0 %v140
    %167 = vmatprep.subr.mxu0 0.0
    %168 = vmatpush1.msra.mxu0 %v141
    %169 = vmatprep.subr.mxu0 0.0
    %170 = vmatpush1.msra.mxu0 %v142
    %171 = vmatprep.subr.mxu0 0.0
    %172 = vmatpush1.msra.mxu0 %v143
    %173 = vmatprep.subr.mxu0 0.0
    %174 = vmatpush1.msra.mxu0 %v144
    %175 = vmatprep.subr.mxu0 0.0
    %176 = vmatpush1.msra.mxu0 %v145
    %177 = vmatprep.subr.mxu0 0.0
    %178 = vmatpush1.msra.mxu0 %v146
    %179 = vmatprep.subr.mxu0 0.0
    %180 = vmatpush1.msra.mxu0 %v147
    %181 = vmatprep.subr.mxu0 0.0
    %182 = vmatpush1.msra.mxu0 %v148
    %183 = vmatprep.subr.mxu0 0.0
    %184 = vmatpush1.msra.mxu0 %v149
    %185 = vmatprep.subr.mxu0 0.0
    %186 = vmatpush1.msra.mxu0 %v150
    %187 = vmatprep.subr.mxu0 0.0
    %188 = vmatpush1.msra.mxu0 %v151
    %189 = vmatprep.subr.mxu0 0.0
    %190 = vmatpush1.msra.mxu0 0.0
    %191 = vmatprep.subr.mxu0 0.0
    %192 = vmatpush1.msra.mxu0 0.0
    %193 = vmatprep.subr.mxu0 0.0
    %194 = vmatpush1.msra.mxu0 0.0
    %195 = vmatprep.subr.mxu0 0.0
    %196 = vmatpush1.msra.mxu0 0.0
    %197 = vmatprep.subr.mxu0 0.0
    %198 = vmatpush1.msra.mxu0 0.0
    %199 = vmatprep.subr.mxu0 0.0
    %200 = vmatpush1.msra.mxu0 0.0
    %201 = vmatprep.subr.mxu0 0.0
    %202 = vmatpush1.msra.mxu0 0.0
    %203 = vmatprep.subr.mxu0 0.0
    %204 = vmatpush1.msra.mxu0 0.0
    %205 = vmatprep.subr.mxu0 0.0
    %206 = vmatpush1.msra.mxu0 0.0
    %207 = vmatprep.subr.mxu0 0.0
    %208 = vmatpush1.msra.mxu0 0.0
    %209 = vmatprep.subr.mxu0 0.0
    %210 = vmatpush1.msra.mxu0 0.0
    %211 = vmatprep.subr.mxu0 0.0
    %212 = vmatpush1.msra.mxu0 0.0
    %213 = vmatprep.subr.mxu0 0.0
    %214 = vmatpush1.msra.mxu0 0.0
    %215 = vmatprep.subr.mxu0 0.0
    %216 = vmatpush1.msra.mxu0 0.0
    %217 = vmatprep.subr.mxu0 0.0
    %218 = vmatpush1.msra.mxu0 0.0
    %219 = vmatprep.subr.mxu0 0.0
    %220 = vmatpush1.msra.mxu0 0.0
    %221 = vmatprep.mubr.f32.mxu0 0.0
    %222 = vmatmul.mubr.f32.gmra.mrb[0].mxu0 %v135
    %v223 = vpop.f32.mrb[0].mxu0
    %v224 = vadd.f32 %v156, %v223
    %v225 = vpop.f32.mrb[0].mxu0
    %226 = vdwg.mxu0
    %v227 = vmax.f32 %v224, 0.0
    %v228 = vld [vmem:[#allocation4 + $0xa0] sm:$0xff]
    %v229 = vld [vmem:[#allocation4 + $0xa8] sm:$0xff]
    %v230 = vld [vmem:[#allocation4 + $0xb0] sm:$0xff]
    %v231 = vld [vmem:[#allocation4 + $0xb8] sm:$0xff]
    %v232 = vld [vmem:[#allocation4 + $0xc0] sm:$0xff]
    %v233 = vld [vmem:[#allocation4 + $0xc8] sm:$0xff]
    %v234 = vld [vmem:[#allocation4 + $0xd0] sm:$0xff]
    %v235 = vld [vmem:[#allocation4 + $0xd8] sm:$0xff]
    %v236 = vld [vmem:[#allocation4 + $0xe0] sm:$0xff]
    %v237 = vld [vmem:[#allocation4 + $0xe8] sm:$0xff]
    %v238 = vld [vmem:[#allocation4 + $0xf0] sm:$0xff]
    %v239 = vld [vmem:[#allocation4 + $0xf8] sm:$0xff]
    %v240 = vld [vmem:[#allocation4 + $0x100] sm:$0xff]
    %v241 = vld [vmem:[#allocation4 + $0x108] sm:$0xff]
    %v242 = vld [vmem:[#allocation4 + $0x110] sm:$0xff]
    %v243 = vld [vmem:[#allocation4 + $0x118] sm:$0xff]
    %v244 = vld [vmem:[#allocation6 + $0x2] sm:$0x1]
    %v245 = vlaneseq
    %v246 = vshrl.u32 %v245, 7
    %v247 = vsub.s32 0, %v246
    %v248 = vrot.slane %v244, %v247
    %249 = vmatprep.subr.mxu0 0.0
    %250 = vmatpush1.msra.mxu0 %v228
    %251 = vmatprep.subr.mxu0 0.0
    %252 = vmatpush1.msra.mxu0 %v229
    %253 = vmatprep.subr.mxu0 0.0
    %254 = vmatpush1.msra.mxu0 %v230
    %255 = vmatprep.subr.mxu0 0.0
    %256 = vmatpush1.msra.mxu0 %v231
    %257 = vmatprep.subr.mxu0 0.0
    %258 = vmatpush1.msra.mxu0 %v232
    %259 = vmatprep.subr.mxu0 0.0
    %260 = vmatpush1.msra.mxu0 %v233
    %261 = vmatprep.subr.mxu0 0.0
    %262 = vmatpush1.msra.mxu0 %v234
    %263 = vmatprep.subr.mxu0 0.0
    %264 = vmatpush1.msra.mxu0 %v235
    %265 = vmatprep.subr.mxu0 0.0
    %266 = vmatpush1.msra.mxu0 %v236
    %267 = vmatprep.subr.mxu0 0.0
    %268 = vmatpush1.msra.mxu0 %v237
    %269 = vmatprep.subr.mxu0 0.0
    %270 = vmatpush1.msra.mxu0 %v238
    %271 = vmatprep.subr.mxu0 0.0
    %272 = vmatpush1.msra.mxu0 %v239
    %273 = vmatprep.subr.mxu0 0.0
    %274 = vmatpush1.msra.mxu0 %v240
    %275 = vmatprep.subr.mxu0 0.0
    %276 = vmatpush1.msra.mxu0 %v241
    %277 = vmatprep.subr.mxu0 0.0
    %278 = vmatpush1.msra.mxu0 %v242
    %279 = vmatprep.subr.mxu0 0.0
    %280 = vmatpush1.msra.mxu0 %v243
    %281 = vmatprep.subr.mxu0 0.0
    %282 = vmatpush1.msra.mxu0 0.0
    %283 = vmatprep.subr.mxu0 0.0
    %284 = vmatpush1.msra.mxu0 0.0
    %285 = vmatprep.subr.mxu0 0.0
    %286 = vmatpush1.msra.mxu0 0.0
    %287 = vmatprep.subr.mxu0 0.0
    %288 = vmatpush1.msra.mxu0 0.0
    %289 = vmatprep.subr.mxu0 0.0
    %290 = vmatpush1.msra.mxu0 0.0
    %291 = vmatprep.subr.mxu0 0.0
    %292 = vmatpush1.msra.mxu0 0.0
    %293 = vmatprep.subr.mxu0 0.0
    %294 = vmatpush1.msra.mxu0 0.0
    %295 = vmatprep.subr.mxu0 0.0
    %296 = vmatpush1.msra.mxu0 0.0
    %297 = vmatprep.subr.mxu0 0.0
    %298 = vmatpush1.msra.mxu0 0.0
    %299 = vmatprep.subr.mxu0 0.0
    %300 = vmatpush1.msra.mxu0 0.0
    %301 = vmatprep.subr.mxu0 0.0
    %302 = vmatpush1.msra.mxu0 0.0
    %303 = vmatprep.subr.mxu0 0.0
    %304 = vmatpush1.msra.mxu0 0.0
    %305 = vmatprep.subr.mxu0 0.0
    %306 = vmatpush1.msra.mxu0 0.0
    %307 = vmatprep.subr.mxu0 0.0
    %308 = vmatpush1.msra.mxu0 0.0
    %309 = vmatprep.subr.mxu0 0.0
    %310 = vmatpush1.msra.mxu0 0.0
    %311 = vmatprep.subr.mxu0 0.0
    %312 = vmatpush1.msra.mxu0 0.0
    %313 = vmatprep.mubr.f32.mxu0 0.0
    %314 = vmatmul.mubr.f32.gmra.mrb[0].mxu0 %v227
    %v315 = vpop.f32.mrb[0].mxu0
    %v316 = vadd.f32 %v248, %v315
    %v317 = vpop.f32.mrb[0].mxu0
    %318 = vdwg.mxu0
    %vm319 = vcmask 15360
    %320 = vst.msk [vmem:[%s3] sm:$0xff] %vm319, %v316
    // Predicated region
    $region26: #{forward.1} parent=1 // pred_check
      _
    $region27: #{forward.1} parent=1 // pred_check_branch
      %322 = sbr.rel (0) target = $region29
    $region28: #{forward.1} parent=1 // pred_region
      _
    $region29: #{forward.1} parent=1 // pred_fallthru
      _
    // Predicated region
    $region30: #{forward.1} parent=1 // pred_check
      _
    $region31: #{forward.1} parent=1 // pred_check_branch
      %324 = sbr.rel (0) target = $region33
    $region32: #{forward.1} parent=1 // pred_region
      _
    $region33: #{forward.1} parent=1 // pred_fallthru
      _
    %325 = vsyncpa [#allocation3], 1
    %326 = vsyncpa [#allocation5], 1

</llo_original>
